<compile_context>
chip_gen: v5e
topology: v5e:2x2
jax: 0.10.0
libtpu: 0.0.40
codegen_flags: <defaults>
</compile_context>

<pallas_src>
import math

import jax
import jax.numpy as jnp
from jax.experimental import pallas as pl
from jax.experimental.pallas import tpu as pltpu


def _round_up(x, m):
    return (x + m - 1) // m * m


# --------------------------- stage 1: support = X @ W ---------------------------
def _support_kernel(x_ref, w_ref, sup_ref):
    sup_ref[...] = jnp.dot(
        x_ref[...], w_ref[...], preferred_element_type=jnp.float32
    ).astype(sup_ref.dtype)


# ------------------ stage 2: out = A @ support + bias (tiled) -------------------
def _aggregate_kernel(mask_ref, adj_ref, sup_ref, b_ref, out_ref, acc_ref):
    i = pl.program_id(0)
    k = pl.program_id(1)
    nk = pl.num_programs(1)

    @pl.when(k == 0)
    def _():
        acc_ref[...] = jnp.zeros_like(acc_ref)

    # Skip MXU work for all-zero adjacency tiles (block-sparse adjacency).
    # TODO(synk): also skip the tile DMA by driving the k index_map from a
    # compacted nonzero-block list instead of a dense per-tile mask.
    @pl.when(mask_ref[i * nk + k] != 0)
    def _():
        acc_ref[...] += jnp.dot(
            adj_ref[...], sup_ref[...], preferred_element_type=jnp.float32
        )

    @pl.when(k == nk - 1)
    def _():
        out_ref[...] = (acc_ref[...] + b_ref[...]).astype(out_ref.dtype)


@jax.jit
def graph_convolution(x, adj, weight, bias):
    """Fused GCN layer.  x:(N,F_in)  adj:(N,N)  weight:(F_in,F_out)  bias:(F_out,)"""
    n, f_in = x.shape
    f_out = weight.shape[1]
    out_dtype = x.dtype

    # Pad so every lane (last) dim is a multiple of 128 and sublane dims of 8.
    f_in_p = _round_up(f_in, 128)
    f_out_p = _round_up(f_out, 128)
    n_p = _round_up(n, 128)
    # 256-sized tiles fill v6e/v7x's 256x256 MXUs; 128 is correct everywhere.
    tile = 256 if n_p % 256 == 0 else 128
    tm = tk = tile
    ni, nk = n_p // tm, n_p // tk

    # bf16 operands (MXU peak dtype, halves HBM traffic for adj); f32 accumulate.
    xp = jnp.zeros((n_p, f_in_p), jnp.bfloat16).at[:n, :f_in].set(
        x.astype(jnp.bfloat16))
    ap = jnp.zeros((n_p, n_p), jnp.bfloat16).at[:n, :n].set(
        adj.astype(jnp.bfloat16))
    wp = jnp.zeros((f_in_p, f_out_p), jnp.bfloat16).at[:f_in, :f_out].set(
        weight.astype(jnp.bfloat16))
    bp = jnp.zeros((1, f_out_p), jnp.float32).at[0, :f_out].set(
        bias.astype(jnp.float32))

    vmem_limit = 48 * 1024 * 1024  # above the 32 MiB default, under v7x's 64 MiB

    # ---- stage 1: support = X @ W (computed once, row-tiled) ----
    support = pl.pallas_call(
        _support_kernel,
        out_shape=jax.ShapeDtypeStruct((n_p, f_out_p), jnp.bfloat16),
        grid_spec=pltpu.PrefetchScalarGridSpec(
            num_scalar_prefetch=0,
            grid=(ni,),
            in_specs=[
                pl.BlockSpec((tm, f_in_p), lambda i: (i, 0)),
                pl.BlockSpec((f_in_p, f_out_p), lambda i: (0, 0)),
            ],
            out_specs=pl.BlockSpec((tm, f_out_p), lambda i: (i, 0)),
        ),
        compiler_params=pltpu.CompilerParams(
            dimension_semantics=("parallel",),
            vmem_limit_bytes=vmem_limit,
        ),
    )(xp, wp)

    # Per-(i,k) adjacency-tile nonzero mask (block-sparse skip), flattened 1D
    # to keep the SMEM footprint small.
    blocks = ap.reshape(ni, tm, nk, tk)
    block_mask = (jnp.max(jnp.abs(blocks), axis=(1, 3)) > 0).astype(
        jnp.int32).reshape(-1)

    # ---- stage 2: out = A @ support + bias (tiled, resident f32 accumulator) ----
    out_p = pl.pallas_call(
        _aggregate_kernel,
        out_shape=jax.ShapeDtypeStruct((n_p, f_out_p), out_dtype),
        grid_spec=pltpu.PrefetchScalarGridSpec(
            num_scalar_prefetch=1,
            grid=(ni, nk),
            in_specs=[
                pl.BlockSpec((tm, tk), lambda i, k, m: (i, k)),
                pl.BlockSpec((tk, f_out_p), lambda i, k, m: (k, 0)),
                pl.BlockSpec((1, f_out_p), lambda i, k, m: (0, 0)),
            ],
            out_specs=pl.BlockSpec((tm, f_out_p), lambda i, k, m: (i, 0)),
            scratch_shapes=[pltpu.VMEM((tm, f_out_p), jnp.float32)],
        ),
        compiler_params=pltpu.CompilerParams(
            dimension_semantics=("parallel", "arbitrary"),
            vmem_limit_bytes=vmem_limit,
        ),
    )(block_mask, ap, support, bp)

    return out_p[:n, :f_out]


def init_params(key, in_features, out_features):
    """Deterministic re-implementation of GraphConvolution.reset_parameters."""
    stdv = 1.0 / math.sqrt(out_features)
    kw, kb = jax.random.split(key)
    weight = jax.random.uniform(
        kw, (in_features, out_features), minval=-stdv, maxval=stdv,
        dtype=jnp.float32)
    bias = jax.random.uniform(
        kb, (out_features,), minval=-stdv, maxval=stdv, dtype=jnp.float32)
    return weight, bias


if __name__ == "__main__":
    # Small synthetic problem: 64 nodes, 32 input features, 64 output features.
    # (At this size the layer is pure fixed overhead; the tiling above is for
    # realistic N where adj no longer fits VMEM.)
    N, F_IN, F_OUT = 64, 32, 64

    key = jax.random.PRNGKey(0)
    k_x, k_adj, k_param = jax.random.split(key, 3)

    x = jax.random.normal(k_x, (N, F_IN), dtype=jnp.float32)

    # Symmetric, row-normalized adjacency (typical GCN preprocessing).
    a = (jax.random.uniform(k_adj, (N, N)) < 0.1).astype(jnp.float32)
    adj = a + a.T + jnp.eye(N, dtype=jnp.float32)
    adj = adj / jnp.sum(adj, axis=1, keepdims=True)

    weight, bias = init_params(k_param, F_IN, F_OUT)

    out = graph_convolution(x, adj, weight, bias)
    out = jax.block_until_ready(out)

    # Pure-JAX f32 reference; tolerance loosened for bf16 operands.
    ref = adj @ (x @ weight) + bias
    assert out.shape == (N, F_OUT)
    max_err = float(jnp.max(jnp.abs(out - ref)))
    assert max_err < 5e-2, f"mismatch vs reference: max abs err {max_err}"

    print("KERNEL_OK")
</pallas_src>

<mosaic_0001>
module attributes {stable_mosaic.version = 11 : i64} {
  func.func @_support_kernel(%arg0: i32, %arg1: memref<128x128xbf16, #tpu.memory_space<vmem>>, %arg2: memref<128x128xbf16, #tpu.memory_space<vmem>>, %arg3: memref<128x128xbf16, #tpu.memory_space<vmem>>) attributes {dimension_semantics = [#tpu.dimension_semantics<parallel>], iteration_bounds = array<i64: 1>, scalar_prefetch = 0 : i64, scratch_operands = 0 : i64, tpu.core_type = #tpu.core_type<tc>, window_params = [{transform_indices = @transform_0, window_bounds = array<i64: 128, 128>}, {pipeline_mode = #tpu.pipeline_mode<synchronous>, transform_indices = @transform_1, window_bounds = array<i64: 128, 128>}, {transform_indices = @transform_2, window_bounds = array<i64: 128, 128>}]} {
    %c0 = arith.constant 0 : index
    %c0_0 = arith.constant 0 : index
    %0 = vector.load %arg1[%c0, %c0_0] : memref<128x128xbf16, #tpu.memory_space<vmem>>, vector<128x128xbf16>
    %c0_1 = arith.constant 0 : index
    %c0_2 = arith.constant 0 : index
    %1 = vector.load %arg2[%c0_1, %c0_2] : memref<128x128xbf16, #tpu.memory_space<vmem>>, vector<128x128xbf16>
    %cst = arith.constant dense<0.000000e+00> : vector<128x128xf32>
    %2 = tpu.matmul %0, %1, %cst {dimension_numbers = #tpu.dot_dimension_numbers<[1], [0], [0], [1], [0, 0, 1, 1], [], []>} : vector<128x128xbf16>, vector<128x128xbf16>, vector<128x128xf32> -> vector<128x128xf32>
    %3 = arith.truncf %2 : vector<128x128xf32> to vector<128x128xbf16>
    %c0_3 = arith.constant 0 : index
    %c0_4 = arith.constant 0 : index
    %4 = vector.load %arg3[%c0_3, %c0_4] : memref<128x128xbf16, #tpu.memory_space<vmem>>, vector<128x128xbf16>
    tpu.vector_store %arg3[%c0_3, %c0_4], %3 {strides = array<i32>} : memref<128x128xbf16, #tpu.memory_space<vmem>>, vector<128x128xbf16>,
    return
  }
  func.func @transform_0(%arg0: i32) -> (i32, i32) {
    %c0_i32 = arith.constant 0 : i32
    %c0_i32_0 = arith.constant 0 : i32
    return %arg0, %c0_i32 : i32, i32
  }
  func.func @transform_1(%arg0: i32) -> (i32, i32) {
    %c0_i32 = arith.constant 0 : i32
    %c0_i32_0 = arith.constant 0 : i32
    %c0_i32_1 = arith.constant 0 : i32
    return %c0_i32, %c0_i32_0 : i32, i32
  }
  func.func @transform_2(%arg0: i32) -> (i32, i32) {
    %c0_i32 = arith.constant 0 : i32
    %c0_i32_0 = arith.constant 0 : i32
    return %arg0, %c0_i32 : i32, i32
  }
}

module attributes {stable_mosaic.version = 11 : i64} {
  func.func @_aggregate_kernel(%arg0: i32, %arg1: i32, %arg2: memref<1xi32, #tpu.memory_space<smem>>, %arg3: memref<128x128xbf16, #tpu.memory_space<vmem>>, %arg4: memref<128x128xbf16, #tpu.memory_space<vmem>>, %arg5: memref<1x128xf32, #tpu.memory_space<vmem>>, %arg6: memref<128x128xf32, #tpu.memory_space<vmem>>, %arg7: memref<128x128xf32, #tpu.memory_space<vmem>>) attributes {dimension_semantics = [#tpu.dimension_semantics<parallel>, #tpu.dimension_semantics<arbitrary>], iteration_bounds = array<i64: 1, 1>, scalar_prefetch = 1 : i64, scratch_operands = 1 : i64, tpu.core_type = #tpu.core_type<tc>, window_params = [{transform_indices = @transform_0, window_bounds = array<i64: 128, 128>}, {transform_indices = @transform_1, window_bounds = array<i64: 128, 128>}, {pipeline_mode = #tpu.pipeline_mode<synchronous>, transform_indices = @transform_2, window_bounds = array<i64: 1, 128>}, {transform_indices = @transform_3, window_bounds = array<i64: 128, 128>}]} {
    %c0_i32 = arith.constant 0 : i32
    %0 = arith.cmpi eq, %arg1, %c0_i32 : i32
    %1 = arith.extui %0 : i1 to i32
    %c0_i32_0 = arith.constant 0 : i32
    %2 = arith.cmpi ne, %1, %c0_i32_0 : i32
    scf.if %2 {
      %cst = arith.constant 0.000000e+00 : f32
      %13 = vector.broadcast %cst : f32 to vector<128x128xf32>
      %c0 = arith.constant 0 : index
      %c0_5 = arith.constant 0 : index
      %14 = vector.load %arg7[%c0, %c0_5] : memref<128x128xf32, #tpu.memory_space<vmem>>, vector<128x128xf32>
      tpu.vector_store %arg7[%c0, %c0_5], %13 {strides = array<i32>} : memref<128x128xf32, #tpu.memory_space<vmem>>, vector<128x128xf32>,
    } else {
    }
    %c1_i32 = arith.constant 1 : i32
    %3 = arith.muli %arg0, %c1_i32 : i32
    %4 = arith.addi %3, %arg1 : i32
    %5 = arith.index_cast %4 : i32 to index
    %6 = memref.load %arg2[%5] : memref<1xi32, #tpu.memory_space<smem>>
    %c0_i32_1 = arith.constant 0 : i32
    %7 = arith.cmpi ne, %6, %c0_i32_1 : i32
    %8 = arith.extui %7 : i1 to i32
    %c0_i32_2 = arith.constant 0 : i32
    %9 = arith.cmpi ne, %8, %c0_i32_2 : i32
    scf.if %9 {
      %c0 = arith.constant 0 : index
      %c0_5 = arith.constant 0 : index
      %13 = vector.load %arg7[%c0, %c0_5] : memref<128x128xf32, #tpu.memory_space<vmem>>, vector<128x128xf32>
      %c0_6 = arith.constant 0 : index
      %c0_7 = arith.constant 0 : index
      %14 = vector.load %arg3[%c0_6, %c0_7] : memref<128x128xbf16, #tpu.memory_space<vmem>>, vector<128x128xbf16>
      %c0_8 = arith.constant 0 : index
      %c0_9 = arith.constant 0 : index
      %15 = vector.load %arg4[%c0_8, %c0_9] : memref<128x128xbf16, #tpu.memory_space<vmem>>, vector<128x128xbf16>
      %cst = arith.constant dense<0.000000e+00> : vector<128x128xf32>
      %16 = tpu.matmul %14, %15, %cst {dimension_numbers = #tpu.dot_dimension_numbers<[1], [0], [0], [1], [0, 0, 1, 1], [], []>} : vector<128x128xbf16>, vector<128x128xbf16>, vector<128x128xf32> -> vector<128x128xf32>
      %17 = arith.addf %13, %16 : vector<128x128xf32>
      %c0_10 = arith.constant 0 : index
      %c0_11 = arith.constant 0 : index
      %18 = vector.load %arg7[%c0_10, %c0_11] : memref<128x128xf32, #tpu.memory_space<vmem>>, vector<128x128xf32>
      tpu.vector_store %arg7[%c0_10, %c0_11], %17 {strides = array<i32>} : memref<128x128xf32, #tpu.memory_space<vmem>>, vector<128x128xf32>,
    } else {
    }
    %c0_i32_3 = arith.constant 0 : i32
    %10 = arith.cmpi eq, %arg1, %c0_i32_3 : i32
    %11 = arith.extui %10 : i1 to i32
    %c0_i32_4 = arith.constant 0 : i32
    %12 = arith.cmpi ne, %11, %c0_i32_4 : i32
    scf.if %12 {
      %c0 = arith.constant 0 : index
      %c0_5 = arith.constant 0 : index
      %13 = vector.load %arg7[%c0, %c0_5] : memref<128x128xf32, #tpu.memory_space<vmem>>, vector<128x128xf32>
      %c0_6 = arith.constant 0 : index
      %c0_7 = arith.constant 0 : index
      %14 = vector.load %arg5[%c0_6, %c0_7] : memref<1x128xf32, #tpu.memory_space<vmem>>, vector<1x128xf32>
      %15 = vector.broadcast %14 : vector<1x128xf32> to vector<128x128xf32>
      %16 = arith.addf %13, %15 : vector<128x128xf32>
      %c0_8 = arith.constant 0 : index
      %c0_9 = arith.constant 0 : index
      %17 = vector.load %arg6[%c0_8, %c0_9] : memref<128x128xf32, #tpu.memory_space<vmem>>, vector<128x128xf32>
      tpu.vector_store %arg6[%c0_8, %c0_9], %16 {strides = array<i32>} : memref<128x128xf32, #tpu.memory_space<vmem>>, vector<128x128xf32>,
    } else {
    }
    return
  }
  func.func @transform_0(%arg0: i32, %arg1: i32, %arg2: memref<1xi32, #tpu.memory_space<smem>>) -> (i32, i32) {
    %c0_i32 = arith.constant 0 : i32
    return %arg0, %arg1 : i32, i32
  }
  func.func @transform_1(%arg0: i32, %arg1: i32, %arg2: memref<1xi32, #tpu.memory_space<smem>>) -> (i32, i32) {
    %c0_i32 = arith.constant 0 : i32
    %c0_i32_0 = arith.constant 0 : i32
    return %arg1, %c0_i32 : i32, i32
  }
  func.func @transform_2(%arg0: i32, %arg1: i32, %arg2: memref<1xi32, #tpu.memory_space<smem>>) -> (i32, i32) {
    %c0_i32 = arith.constant 0 : i32
    %c0_i32_0 = arith.constant 0 : i32
    %c0_i32_1 = arith.constant 0 : i32
    return %c0_i32, %c0_i32_0 : i32, i32
  }
  func.func @transform_3(%arg0: i32, %arg1: i32, %arg2: memref<1xi32, #tpu.memory_space<smem>>) -> (i32, i32) {
    %c0_i32 = arith.constant 0 : i32
    %c0_i32_0 = arith.constant 0 : i32
    return %arg0, %c0_i32 : i32, i32
  }
}

</mosaic_0001>

<llo_original>
// kernel: graph_convolution.2
$region0: #{graph_convolution.2}
  #allocation0 [shape = 'u32[]', space=smem, size = 0x4, offset = 0x4, fixed_abs, tag = 'smem constant byte address 0x4 - core index']
  #allocation1 [shape = 'u32[72,128]{1,0:T(1,128)}', space=vmem, size = 0x9000, scoped, tag = 'internal scratch']
  %s0 = inlined_call_operand.vmem [shape: bf16[128,128], index: 0, kind: input, shape index: {}]
  %s1 = inlined_call_operand.vmem [shape: bf16[128,128], index: 1, kind: input, shape index: {}]
  %s2 = inlined_call_operand.vmem [shape: bf16[128,128], index: 2, kind: output, shape index: {}]
  %s3 = sld [smem:[#allocation0]]
  $region18: #{graph_convolution.2} parent=0
    _
  %s5 = ssub.s32 1, %s3
  %s6 = scalar_select 0, %s5, %s3
  // Predicated region
  $region2: #{graph_convolution.2} parent=0 // pred_check
    _
  $region3: #{graph_convolution.2} parent=0 // pred_check_branch
    %8 = sbr.rel (0) target = $region5
  $region4: #{graph_convolution.2} parent=0 // pred_region
    _
  $region5: #{graph_convolution.2} parent=0 // pred_fallthru
    _
  // Predicated region
  $region6: #{graph_convolution.2} parent=0 // pred_check
    _
  $region7: #{graph_convolution.2} parent=0 // pred_check_branch
    %10 = sbr.rel (0) target = $region9
  $region8: #{graph_convolution.2} parent=0 // pred_region
    _
  $region9: #{graph_convolution.2} parent=0 // pred_fallthru
    _
  %v11 = vld [vmem:[%s0] sm:$0xf]
  %v12 = vld [vmem:[%s0 + $0x4] sm:$0xf]
  %v13 = vld [vmem:[%s0 + $0x8] sm:$0xf]
  %v14 = vld [vmem:[%s0 + $0xc] sm:$0xf]
  %v15 = vld [vmem:[%s0 + $0x10] sm:$0xf]
  %v16 = vld [vmem:[%s0 + $0x14] sm:$0xf]
  %v17 = vld [vmem:[%s0 + $0x18] sm:$0xf]
  %v18 = vld [vmem:[%s0 + $0x1c] sm:$0xf]
  %v19 = vld [vmem:[%s0 + $0x20] sm:$0xf]
  %v20 = vld [vmem:[%s0 + $0x24] sm:$0xf]
  %v21 = vld [vmem:[%s0 + $0x28] sm:$0xf]
  %v22 = vld [vmem:[%s0 + $0x2c] sm:$0xf]
  %v23 = vld [vmem:[%s0 + $0x30] sm:$0xf]
  %v24 = vld [vmem:[%s0 + $0x34] sm:$0xf]
  %v25 = vld [vmem:[%s0 + $0x38] sm:$0xf]
  %v26 = vld [vmem:[%s0 + $0x3c] sm:$0xf]
  %v27 = vld [vmem:[%s1] sm:$0xf]
  %v28 = vld [vmem:[%s1 + $0x4] sm:$0xf]
  %v29 = vld [vmem:[%s1 + $0x8] sm:$0xf]
  %v30 = vld [vmem:[%s1 + $0xc] sm:$0xf]
  %v31 = vld [vmem:[%s1 + $0x10] sm:$0xf]
  %v32 = vld [vmem:[%s1 + $0x14] sm:$0xf]
  %v33 = vld [vmem:[%s1 + $0x18] sm:$0xf]
  %v34 = vld [vmem:[%s1 + $0x1c] sm:$0xf]
  %v35 = vld [vmem:[%s1 + $0x20] sm:$0xf]
  %v36 = vld [vmem:[%s1 + $0x24] sm:$0xf]
  %v37 = vld [vmem:[%s1 + $0x28] sm:$0xf]
  %v38 = vld [vmem:[%s1 + $0x2c] sm:$0xf]
  %v39 = vld [vmem:[%s1 + $0x30] sm:$0xf]
  %v40 = vld [vmem:[%s1 + $0x34] sm:$0xf]
  %v41 = vld [vmem:[%s1 + $0x38] sm:$0xf]
  %v42 = vld [vmem:[%s1 + $0x3c] sm:$0xf]
  %v59 = vunpack.c.l.b16 %v11
  %v60 = vunpack.c.l.b16 %v12
  %v61 = vunpack.c.l.b16 %v13
  %v62 = vunpack.c.l.b16 %v14
  %v63 = vunpack.c.l.b16 %v15
  %v64 = vunpack.c.l.b16 %v16
  %v65 = vunpack.c.l.b16 %v17
  %v66 = vunpack.c.l.b16 %v18
  %v67 = vunpack.c.l.b16 %v19
  %v68 = vunpack.c.l.b16 %v20
  %v69 = vunpack.c.l.b16 %v21
  %v70 = vunpack.c.l.b16 %v22
  %v71 = vunpack.c.l.b16 %v23
  %v72 = vunpack.c.l.b16 %v24
  %v73 = vunpack.c.l.b16 %v25
  %v74 = vunpack.c.l.b16 %v26
  %v75 = vpack.c.b16 %v60, %v59
  %v76 = vpack.c.b16 %v62, %v61
  %v77 = vpack.c.b16 %v64, %v63
  %v78 = vpack.c.b16 %v66, %v65
  %v79 = vpack.c.b16 %v68, %v67
  %v80 = vpack.c.b16 %v70, %v69
  %v81 = vpack.c.b16 %v72, %v71
  %v82 = vpack.c.b16 %v74, %v73
  %v107 = vunpack.c.l.b16 %v27
  %v108 = vunpack.c.l.b16 %v28
  %v109 = vunpack.c.l.b16 %v29
  %v110 = vunpack.c.l.b16 %v30
  %v111 = vunpack.c.l.b16 %v31
  %v112 = vunpack.c.l.b16 %v32
  %v113 = vunpack.c.l.b16 %v33
  %v114 = vunpack.c.l.b16 %v34
  %v115 = vunpack.c.l.b16 %v35
  %v116 = vunpack.c.l.b16 %v36
  %v117 = vunpack.c.l.b16 %v37
  %v118 = vunpack.c.l.b16 %v38
  %v119 = vunpack.c.l.b16 %v39
  %v120 = vunpack.c.l.b16 %v40
  %v121 = vunpack.c.l.b16 %v41
  %v122 = vunpack.c.l.b16 %v42
  %v123 = vpack.c.b16 %v108, %v107
  %v124 = vpack.c.b16 %v110, %v109
  %v125 = vpack.c.b16 %v112, %v111
  %v126 = vpack.c.b16 %v114, %v113
  %v127 = vpack.c.b16 %v116, %v115
  %v128 = vpack.c.b16 %v118, %v117
  %v129 = vpack.c.b16 %v120, %v119
  %v130 = vpack.c.b16 %v122, %v121
  %139 = vmatpush.bf16.msra.mxu0 %v130
  %140 = vmatpush.bf16.msra.mxu0 %v129
  %141 = vmatpush.bf16.msra.mxu0 %v128
  %142 = vmatpush.bf16.msra.mxu0 %v127
  %143 = vmatpush.bf16.msra.mxu0 %v126
  %144 = vmatpush.bf16.msra.mxu0 %v125
  %145 = vmatpush.bf16.msra.mxu0 %v124
  %146 = vmatpush.bf16.msra.mxu0 %v123
  %147 = vmatmul.bf16.gmra.mxu0 %v75
  %v148 = vpop.f32.mrf.mxu0
  %v149 = vadd.f32 0.0, %v148
  %v150 = vpop.f32.mrf.mxu0
  %v151 = vadd.f32 0.0, %v150
  %152 = vmatmul.bf16.gmra.mxu0 %v76
  %v153 = vpop.f32.mrf.mxu0
  %v154 = vadd.f32 0.0, %v153
  %v155 = vpop.f32.mrf.mxu0
  %v156 = vadd.f32 0.0, %v155
  %157 = vmatmul.bf16.gmra.mxu0 %v77
  %v158 = vpop.f32.mrf.mxu0
  %v159 = vadd.f32 0.0, %v158
  %v160 = vpop.f32.mrf.mxu0
  %v161 = vadd.f32 0.0, %v160
  %162 = vmatmul.bf16.gmra.mxu0 %v78
  %v163 = vpop.f32.mrf.mxu0
  %v164 = vadd.f32 0.0, %v163
  %v165 = vpop.f32.mrf.mxu0
  %v166 = vadd.f32 0.0, %v165
  %167 = vmatmul.bf16.gmra.mxu0 %v79
  %v168 = vpop.f32.mrf.mxu0
  %v169 = vadd.f32 0.0, %v168
  %v170 = vpop.f32.mrf.mxu0
  %v171 = vadd.f32 0.0, %v170
  %172 = vmatmul.bf16.gmra.mxu0 %v80
  %v173 = vpop.f32.mrf.mxu0
  %v174 = vadd.f32 0.0, %v173
  %v175 = vpop.f32.mrf.mxu0
  %v176 = vadd.f32 0.0, %v175
  %177 = vmatmul.bf16.gmra.mxu0 %v81
  %v178 = vpop.f32.mrf.mxu0
  %v179 = vadd.f32 0.0, %v178
  %v180 = vpop.f32.mrf.mxu0
  %v181 = vadd.f32 0.0, %v180
  %182 = vmatmul.bf16.gmra.mxu0 %v82
  %v183 = vpop.f32.mrf.mxu0
  %v184 = vadd.f32 0.0, %v183
  %v185 = vpop.f32.mrf.mxu0
  %v186 = vadd.f32 0.0, %v185
  %187 = vdwg.mxu0
  %v188 = vpack.c.bf16 %v149, %v149
  %v189 = vpack.c.bf16 %v151, %v151
  %v190 = vpack.c.bf16 %v154, %v154
  %v191 = vpack.c.bf16 %v156, %v156
  %v192 = vpack.c.bf16 %v159, %v159
  %v193 = vpack.c.bf16 %v161, %v161
  %v194 = vpack.c.bf16 %v164, %v164
  %v195 = vpack.c.bf16 %v166, %v166
  %v196 = vpack.c.bf16 %v169, %v169
  %v197 = vpack.c.bf16 %v171, %v171
  %v198 = vpack.c.bf16 %v174, %v174
  %v199 = vpack.c.bf16 %v176, %v176
  %v200 = vpack.c.bf16 %v179, %v179
  %v201 = vpack.c.bf16 %v181, %v181
  %v202 = vpack.c.bf16 %v184, %v184
  %v203 = vpack.c.bf16 %v186, %v186
  %204 = vst [vmem:[%s2] sm:$0xf] %v188
  %205 = vst [vmem:[%s2 + $0x4] sm:$0xf] %v189
  %206 = vst [vmem:[%s2 + $0x8] sm:$0xf] %v190
  %207 = vst [vmem:[%s2 + $0xc] sm:$0xf] %v191
  %208 = vst [vmem:[%s2 + $0x10] sm:$0xf] %v192
  %209 = vst [vmem:[%s2 + $0x14] sm:$0xf] %v193
  %210 = vst [vmem:[%s2 + $0x18] sm:$0xf] %v194
  %211 = vst [vmem:[%s2 + $0x1c] sm:$0xf] %v195
  %212 = vst [vmem:[%s2 + $0x20] sm:$0xf] %v196
  %213 = vst [vmem:[%s2 + $0x24] sm:$0xf] %v197
  %214 = vst [vmem:[%s2 + $0x28] sm:$0xf] %v198
  %215 = vst [vmem:[%s2 + $0x2c] sm:$0xf] %v199
  %216 = vst [vmem:[%s2 + $0x30] sm:$0xf] %v200
  %217 = vst [vmem:[%s2 + $0x34] sm:$0xf] %v201
  %218 = vst [vmem:[%s2 + $0x38] sm:$0xf] %v202
  %219 = vst [vmem:[%s2 + $0x3c] sm:$0xf] %v203
  // Predicated region
  $region10: #{graph_convolution.2} parent=0 // pred_check
    _
  $region11: #{graph_convolution.2} parent=0 // pred_check_branch
    %221 = sbr.rel (0) target = $region13
  $region12: #{graph_convolution.2} parent=0 // pred_region
    _
  $region13: #{graph_convolution.2} parent=0 // pred_fallthru
    _
  // Predicated region
  $region14: #{graph_convolution.2} parent=0 // pred_check
    _
  $region15: #{graph_convolution.2} parent=0 // pred_check_branch
    %223 = sbr.rel (0) target = $region17
  $region16: #{graph_convolution.2} parent=0 // pred_region
    _
  $region17: #{graph_convolution.2} parent=0 // pred_fallthru
    _

// kernel: graph_convolution.3
$region0: #{graph_convolution.3}
  #allocation0 [shape = 'u32[]', space=smem, size = 0x4, offset = 0x4, fixed_abs, tag = 'smem constant byte address 0x4 - core index']
  #allocation1 [shape = 'u32[72,128]{1,0:T(1,128)}', space=vmem, size = 0x9000, scoped, tag = 'internal scratch']
  #allocation2 [shape = 'f32[128,128]{1,0:T(8,128)}', space=vmem, size = 0x10000, scoped, tag = 'scratch operand']
  #allocation3 [shape = 's32[1]{0}', space=sflag, size = 0x4, scoped, tag = 'scoped memory for graph_convolution.3']
  #allocation4 [shape = 's32[1]{0:T(128)S(6)}', space=smem, size = 0x200, scoped, tag = 'prefetched SMEM operand 0']
  %s0 = inlined_call_operand.<no memory space> [shape: s32[1], index: 0, kind: input, shape index: {}]
  %s1 = inlined_call_operand.vmem [shape: bf16[128,128], index: 1, kind: input, shape index: {}]
  %s2 = inlined_call_operand.vmem [shape: bf16[128,128], index: 2, kind: input, shape index: {}]
  %s3 = inlined_call_operand.vmem [shape: f32[1,128], index: 3, kind: input, shape index: {}]
  %s4 = inlined_call_operand.vmem [shape: f32[128,128], index: 4, kind: output, shape index: {}]
  %s5 = sld [smem:[#allocation0]]
  $region34: #{graph_convolution.3} parent=0
    _
  %s7 = ssub.s32 1, %s5
  %s8 = scalar_select 0, %s7, %s5
  %9 = sst [smem:[#allocation4]] %s0
  // Predicated region
  $region2: #{graph_convolution.3} parent=0 // pred_check
    _
  $region3: #{graph_convolution.3} parent=0 // pred_check_branch
    %11 = sbr.rel (0) target = $region5
  $region4: #{graph_convolution.3} parent=0 // pred_region
    _
  $region5: #{graph_convolution.3} parent=0 // pred_fallthru
    _
  // Predicated region
  $region6: #{graph_convolution.3} parent=0 // pred_check
    _
  $region7: #{graph_convolution.3} parent=0 // pred_check_branch
    %13 = sbr.rel (0) target = $region9
  $region8: #{graph_convolution.3} parent=0 // pred_region
    _
  $region9: #{graph_convolution.3} parent=0 // pred_fallthru
    _
  // Predicated region
  $region10: #{graph_convolution.3} parent=0 // pred_check
    _
  $region11: #{graph_convolution.3} parent=0 // pred_check_branch
    %15 = sbr.rel (0) target = $region13
  $region12: #{graph_convolution.3} parent=0 // pred_region
    _
  $region13: #{graph_convolution.3} parent=0 // pred_fallthru
    _
  %p16 = scmp.eq.s32.totalorder 0, 0
  // Predicated region
  $region14: #{graph_convolution.3} parent=0 // pred_check
    %p17 = pneg %p16
  $region15: #{graph_convolution.3} parent=0 // pred_check_branch
    %19 = sbr.rel (%p17) target = $region17
  $region16: #{graph_convolution.3} parent=0 // pred_region
    %20 = vst [vmem:[#allocation2] sm:$0xff] 0.0
    %21 = vst [vmem:[#allocation2 + $0x8] sm:$0xff] 0.0
    %22 = vst [vmem:[#allocation2 + $0x10] sm:$0xff] 0.0
    %23 = vst [vmem:[#allocation2 + $0x18] sm:$0xff] 0.0
    %24 = vst [vmem:[#allocation2 + $0x20] sm:$0xff] 0.0
    %25 = vst [vmem:[#allocation2 + $0x28] sm:$0xff] 0.0
    %26 = vst [vmem:[#allocation2 + $0x30] sm:$0xff] 0.0
    %27 = vst [vmem:[#allocation2 + $0x38] sm:$0xff] 0.0
    %28 = vst [vmem:[#allocation2 + $0x40] sm:$0xff] 0.0
    %29 = vst [vmem:[#allocation2 + $0x48] sm:$0xff] 0.0
    %30 = vst [vmem:[#allocation2 + $0x50] sm:$0xff] 0.0
    %31 = vst [vmem:[#allocation2 + $0x58] sm:$0xff] 0.0
    %32 = vst [vmem:[#allocation2 + $0x60] sm:$0xff] 0.0
    %33 = vst [vmem:[#allocation2 + $0x68] sm:$0xff] 0.0
    %34 = vst [vmem:[#allocation2 + $0x70] sm:$0xff] 0.0
    %35 = vst [vmem:[#allocation2 + $0x78] sm:$0xff] 0.0
  $region17: #{graph_convolution.3} parent=0 // pred_fallthru
    _
  %s36 = sadd.s32 0, 0
  %s37 = sld [smem:[#allocation4 + %s36]]
  %p38 = scmp.ne.s32.totalorder %s37, 0
  // Predicated region
  $region18: #{graph_convolution.3} parent=0 // pred_check
    %p39 = pneg %p38
  $region19: #{graph_convolution.3} parent=0 // pred_check_branch
    %41 = sbr.rel (%p39) target = $region21
  $region20: #{graph_convolution.3} parent=0 // pred_region
    %v42 = vld [vmem:[#allocation2] sm:$0xff]
    %v43 = vld [vmem:[#allocation2 + $0x8] sm:$0xff]
    %v44 = vld [vmem:[#allocation2 + $0x10] sm:$0xff]
    %v45 = vld [vmem:[#allocation2 + $0x18] sm:$0xff]
    %v46 = vld [vmem:[#allocation2 + $0x20] sm:$0xff]
    %v47 = vld [vmem:[#allocation2 + $0x28] sm:$0xff]
    %v48 = vld [vmem:[#allocation2 + $0x30] sm:$0xff]
    %v49 = vld [vmem:[#allocation2 + $0x38] sm:$0xff]
    %v50 = vld [vmem:[#allocation2 + $0x40] sm:$0xff]
    %v51 = vld [vmem:[#allocation2 + $0x48] sm:$0xff]
    %v52 = vld [vmem:[#allocation2 + $0x50] sm:$0xff]
    %v53 = vld [vmem:[#allocation2 + $0x58] sm:$0xff]
    %v54 = vld [vmem:[#allocation2 + $0x60] sm:$0xff]
    %v55 = vld [vmem:[#allocation2 + $0x68] sm:$0xff]
    %v56 = vld [vmem:[#allocation2 + $0x70] sm:$0xff]
    %v57 = vld [vmem:[#allocation2 + $0x78] sm:$0xff]
    %v58 = vld [vmem:[%s1] sm:$0xf]
    %v59 = vld [vmem:[%s1 + $0x4] sm:$0xf]
    %v60 = vld [vmem:[%s1 + $0x8] sm:$0xf]
    %v61 = vld [vmem:[%s1 + $0xc] sm:$0xf]
    %v62 = vld [vmem:[%s1 + $0x10] sm:$0xf]
    %v63 = vld [vmem:[%s1 + $0x14] sm:$0xf]
    %v64 = vld [vmem:[%s1 + $0x18] sm:$0xf]
    %v65 = vld [vmem:[%s1 + $0x1c] sm:$0xf]
    %v66 = vld [vmem:[%s1 + $0x20] sm:$0xf]
    %v67 = vld [vmem:[%s1 + $0x24] sm:$0xf]
    %v68 = vld [vmem:[%s1 + $0x28] sm:$0xf]
    %v69 = vld [vmem:[%s1 + $0x2c] sm:$0xf]
    %v70 = vld [vmem:[%s1 + $0x30] sm:$0xf]
    %v71 = vld [vmem:[%s1 + $0x34] sm:$0xf]
    %v72 = vld [vmem:[%s1 + $0x38] sm:$0xf]
    %v73 = vld [vmem:[%s1 + $0x3c] sm:$0xf]
    %v74 = vld [vmem:[%s2] sm:$0xf]
    %v75 = vld [vmem:[%s2 + $0x4] sm:$0xf]
    %v76 = vld [vmem:[%s2 + $0x8] sm:$0xf]
    %v77 = vld [vmem:[%s2 + $0xc] sm:$0xf]
    %v78 = vld [vmem:[%s2 + $0x10] sm:$0xf]
    %v79 = vld [vmem:[%s2 + $0x14] sm:$0xf]
    %v80 = vld [vmem:[%s2 + $0x18] sm:$0xf]
    %v81 = vld [vmem:[%s2 + $0x1c] sm:$0xf]
    %v82 = vld [vmem:[%s2 + $0x20] sm:$0xf]
    %v83 = vld [vmem:[%s2 + $0x24] sm:$0xf]
    %v84 = vld [vmem:[%s2 + $0x28] sm:$0xf]
    %v85 = vld [vmem:[%s2 + $0x2c] sm:$0xf]
    %v86 = vld [vmem:[%s2 + $0x30] sm:$0xf]
    %v87 = vld [vmem:[%s2 + $0x34] sm:$0xf]
    %v88 = vld [vmem:[%s2 + $0x38] sm:$0xf]
    %v89 = vld [vmem:[%s2 + $0x3c] sm:$0xf]
    %v106 = vunpack.c.l.b16 %v58
    %v107 = vunpack.c.l.b16 %v59
    %v108 = vunpack.c.l.b16 %v60
    %v109 = vunpack.c.l.b16 %v61
    %v110 = vunpack.c.l.b16 %v62
    %v111 = vunpack.c.l.b16 %v63
    %v112 = vunpack.c.l.b16 %v64
    %v113 = vunpack.c.l.b16 %v65
    %v114 = vunpack.c.l.b16 %v66
    %v115 = vunpack.c.l.b16 %v67
    %v116 = vunpack.c.l.b16 %v68
    %v117 = vunpack.c.l.b16 %v69
    %v118 = vunpack.c.l.b16 %v70
    %v119 = vunpack.c.l.b16 %v71
    %v120 = vunpack.c.l.b16 %v72
    %v121 = vunpack.c.l.b16 %v73
    %v122 = vpack.c.b16 %v107, %v106
    %v123 = vpack.c.b16 %v109, %v108
    %v124 = vpack.c.b16 %v111, %v110
    %v125 = vpack.c.b16 %v113, %v112
    %v126 = vpack.c.b16 %v115, %v114
    %v127 = vpack.c.b16 %v117, %v116
    %v128 = vpack.c.b16 %v119, %v118
    %v129 = vpack.c.b16 %v121, %v120
    %v154 = vunpack.c.l.b16 %v74
    %v155 = vunpack.c.l.b16 %v75
    %v156 = vunpack.c.l.b16 %v76
    %v157 = vunpack.c.l.b16 %v77
    %v158 = vunpack.c.l.b16 %v78
    %v159 = vunpack.c.l.b16 %v79
    %v160 = vunpack.c.l.b16 %v80
    %v161 = vunpack.c.l.b16 %v81
    %v162 = vunpack.c.l.b16 %v82
    %v163 = vunpack.c.l.b16 %v83
    %v164 = vunpack.c.l.b16 %v84
    %v165 = vunpack.c.l.b16 %v85
    %v166 = vunpack.c.l.b16 %v86
    %v167 = vunpack.c.l.b16 %v87
    %v168 = vunpack.c.l.b16 %v88
    %v169 = vunpack.c.l.b16 %v89
    %v170 = vpack.c.b16 %v155, %v154
    %v171 = vpack.c.b16 %v157, %v156
    %v172 = vpack.c.b16 %v159, %v158
    %v173 = vpack.c.b16 %v161, %v160
    %v174 = vpack.c.b16 %v163, %v162
    %v175 = vpack.c.b16 %v165, %v164
    %v176 = vpack.c.b16 %v167, %v166
    %v177 = vpack.c.b16 %v169, %v168
    %186 = vmatpush.bf16.msra.mxu0 %v177
    %187 = vmatpush.bf16.msra.mxu0 %v176
    %188 = vmatpush.bf16.msra.mxu0 %v175
    %189 = vmatpush.bf16.msra.mxu0 %v174
    %190 = vmatpush.bf16.msra.mxu0 %v173
    %191 = vmatpush.bf16.msra.mxu0 %v172
    %192 = vmatpush.bf16.msra.mxu0 %v171
    %193 = vmatpush.bf16.msra.mxu0 %v170
    %194 = vmatmul.bf16.gmra.mxu0 %v122
    %v195 = vpop.f32.mrf.mxu0
    %v196 = vadd.f32 0.0, %v195
    %v197 = vpop.f32.mrf.mxu0
    %v198 = vadd.f32 0.0, %v197
    %199 = vmatmul.bf16.gmra.mxu0 %v123
    %v200 = vpop.f32.mrf.mxu0
    %v201 = vadd.f32 0.0, %v200
    %v202 = vpop.f32.mrf.mxu0
    %v203 = vadd.f32 0.0, %v202
    %204 = vmatmul.bf16.gmra.mxu0 %v124
    %v205 = vpop.f32.mrf.mxu0
    %v206 = vadd.f32 0.0, %v205
    %v207 = vpop.f32.mrf.mxu0
    %v208 = vadd.f32 0.0, %v207
    %209 = vmatmul.bf16.gmra.mxu0 %v125
    %v210 = vpop.f32.mrf.mxu0
    %v211 = vadd.f32 0.0, %v210
    %v212 = vpop.f32.mrf.mxu0
    %v213 = vadd.f32 0.0, %v212
    %214 = vmatmul.bf16.gmra.mxu0 %v126
    %v215 = vpop.f32.mrf.mxu0
    %v216 = vadd.f32 0.0, %v215
    %v217 = vpop.f32.mrf.mxu0
    %v218 = vadd.f32 0.0, %v217
    %219 = vmatmul.bf16.gmra.mxu0 %v127
    %v220 = vpop.f32.mrf.mxu0
    %v221 = vadd.f32 0.0, %v220
    %v222 = vpop.f32.mrf.mxu0
    %v223 = vadd.f32 0.0, %v222
    %224 = vmatmul.bf16.gmra.mxu0 %v128
    %v225 = vpop.f32.mrf.mxu0
    %v226 = vadd.f32 0.0, %v225
    %v227 = vpop.f32.mrf.mxu0
    %v228 = vadd.f32 0.0, %v227
    %229 = vmatmul.bf16.gmra.mxu0 %v129
    %v230 = vpop.f32.mrf.mxu0
    %v231 = vadd.f32 0.0, %v230
    %v232 = vpop.f32.mrf.mxu0
    %v233 = vadd.f32 0.0, %v232
    %234 = vdwg.mxu0
    %v235 = vadd.f32 %v42, %v196
    %v236 = vadd.f32 %v43, %v198
    %v237 = vadd.f32 %v44, %v201
    %v238 = vadd.f32 %v45, %v203
    %v239 = vadd.f32 %v46, %v206
    %v240 = vadd.f32 %v47, %v208
    %v241 = vadd.f32 %v48, %v211
    %v242 = vadd.f32 %v49, %v213
    %v243 = vadd.f32 %v50, %v216
    %v244 = vadd.f32 %v51, %v218
    %v245 = vadd.f32 %v52, %v221
    %v246 = vadd.f32 %v53, %v223
    %v247 = vadd.f32 %v54, %v226
    %v248 = vadd.f32 %v55, %v228
    %v249 = vadd.f32 %v56, %v231
    %v250 = vadd.f32 %v57, %v233
    %251 = vst [vmem:[#allocation2] sm:$0xff] %v235
    %252 = vst [vmem:[#allocation2 + $0x8] sm:$0xff] %v236
    %253 = vst [vmem:[#allocation2 + $0x10] sm:$0xff] %v237
    %254 = vst [vmem:[#allocation2 + $0x18] sm:$0xff] %v238
    %255 = vst [vmem:[#allocation2 + $0x20] sm:$0xff] %v239
    %256 = vst [vmem:[#allocation2 + $0x28] sm:$0xff] %v240
    %257 = vst [vmem:[#allocation2 + $0x30] sm:$0xff] %v241
    %258 = vst [vmem:[#allocation2 + $0x38] sm:$0xff] %v242
    %259 = vst [vmem:[#allocation2 + $0x40] sm:$0xff] %v243
    %260 = vst [vmem:[#allocation2 + $0x48] sm:$0xff] %v244
    %261 = vst [vmem:[#allocation2 + $0x50] sm:$0xff] %v245
    %262 = vst [vmem:[#allocation2 + $0x58] sm:$0xff] %v246
    %263 = vst [vmem:[#allocation2 + $0x60] sm:$0xff] %v247
    %264 = vst [vmem:[#allocation2 + $0x68] sm:$0xff] %v248
    %265 = vst [vmem:[#allocation2 + $0x70] sm:$0xff] %v249
    %266 = vst [vmem:[#allocation2 + $0x78] sm:$0xff] %v250
  $region21: #{graph_convolution.3} parent=0 // pred_fallthru
    _
  // Predicated region
  $region22: #{graph_convolution.3} parent=0 // pred_check
    %p267 = pneg %p16
  $region23: #{graph_convolution.3} parent=0 // pred_check_branch
    %269 = sbr.rel (%p267) target = $region25
  $region24: #{graph_convolution.3} parent=0 // pred_region
    %v270 = vld [vmem:[#allocation2] sm:$0xff]
    %v271 = vld [vmem:[#allocation2 + $0x8] sm:$0xff]
    %v272 = vld [vmem:[#allocation2 + $0x10] sm:$0xff]
    %v273 = vld [vmem:[#allocation2 + $0x18] sm:$0xff]
    %v274 = vld [vmem:[#allocation2 + $0x20] sm:$0xff]
    %v275 = vld [vmem:[#allocation2 + $0x28] sm:$0xff]
    %v276 = vld [vmem:[#allocation2 + $0x30] sm:$0xff]
    %v277 = vld [vmem:[#allocation2 + $0x38] sm:$0xff]
    %v278 = vld [vmem:[#allocation2 + $0x40] sm:$0xff]
    %v279 = vld [vmem:[#allocation2 + $0x48] sm:$0xff]
    %v280 = vld [vmem:[#allocation2 + $0x50] sm:$0xff]
    %v281 = vld [vmem:[#allocation2 + $0x58] sm:$0xff]
    %v282 = vld [vmem:[#allocation2 + $0x60] sm:$0xff]
    %v283 = vld [vmem:[#allocation2 + $0x68] sm:$0xff]
    %v284 = vld [vmem:[#allocation2 + $0x70] sm:$0xff]
    %v285 = vld [vmem:[#allocation2 + $0x78] sm:$0xff]
    %v286 = vld [vmem:[%s3] sm:$0x1]
    %v288 = vperm.slane %v286, 0
    %v290 = vadd.f32 %v270, %v288
    %v291 = vadd.f32 %v271, %v288
    %v292 = vadd.f32 %v272, %v288
    %v293 = vadd.f32 %v273, %v288
    %v294 = vadd.f32 %v274, %v288
    %v295 = vadd.f32 %v275, %v288
    %v296 = vadd.f32 %v276, %v288
    %v297 = vadd.f32 %v277, %v288
    %v298 = vadd.f32 %v278, %v288
    %v299 = vadd.f32 %v279, %v288
    %v300 = vadd.f32 %v280, %v288
    %v301 = vadd.f32 %v281, %v288
    %v302 = vadd.f32 %v282, %v288
    %v303 = vadd.f32 %v283, %v288
    %v304 = vadd.f32 %v284, %v288
    %v305 = vadd.f32 %v285, %v288
    %306 = vst [vmem:[%s4] sm:$0xff] %v290
    %307 = vst [vmem:[%s4 + $0x8] sm:$0xff] %v291
    %308 = vst [vmem:[%s4 + $0x10] sm:$0xff] %v292
    %309 = vst [vmem:[%s4 + $0x18] sm:$0xff] %v293
    %310 = vst [vmem:[%s4 + $0x20] sm:$0xff] %v294
    %311 = vst [vmem:[%s4 + $0x28] sm:$0xff] %v295
    %312 = vst [vmem:[%s4 + $0x30] sm:$0xff] %v296
    %313 = vst [vmem:[%s4 + $0x38] sm:$0xff] %v297
    %314 = vst [vmem:[%s4 + $0x40] sm:$0xff] %v298
    %315 = vst [vmem:[%s4 + $0x48] sm:$0xff] %v299
    %316 = vst [vmem:[%s4 + $0x50] sm:$0xff] %v300
    %317 = vst [vmem:[%s4 + $0x58] sm:$0xff] %v301
    %318 = vst [vmem:[%s4 + $0x60] sm:$0xff] %v302
    %319 = vst [vmem:[%s4 + $0x68] sm:$0xff] %v303
    %320 = vst [vmem:[%s4 + $0x70] sm:$0xff] %v304
    %321 = vst [vmem:[%s4 + $0x78] sm:$0xff] %v305
  $region25: #{graph_convolution.3} parent=0 // pred_fallthru
    _
  // Predicated region
  $region26: #{graph_convolution.3} parent=0 // pred_check
    _
  $region27: #{graph_convolution.3} parent=0 // pred_check_branch
    %323 = sbr.rel (0) target = $region29
  $region28: #{graph_convolution.3} parent=0 // pred_region
    _
  $region29: #{graph_convolution.3} parent=0 // pred_fallthru
    _
  // Predicated region
  $region30: #{graph_convolution.3} parent=0 // pred_check
    _
  $region31: #{graph_convolution.3} parent=0 // pred_check_branch
    %325 = sbr.rel (0) target = $region33
  $region32: #{graph_convolution.3} parent=0 // pred_region
    _
  $region33: #{graph_convolution.3} parent=0 // pred_fallthru
    _

</llo_original>
